<compile_context>
chip_gen: v5e
topology: v5e:2x2
jax: 0.10.0
libtpu: 0.0.40
codegen_flags: <defaults>
</compile_context>

<pallas_src>
import functools

import jax
import jax.numpy as jnp
from jax.experimental import pallas as pl
from jax.experimental.pallas import tpu as pltpu


# ---------------------------------------------------------------------------
# Generation-aware VMEM sizing.
# ---------------------------------------------------------------------------
def _vmem_budget_and_limit():
    """(streaming-slab budget, vmem_limit_bytes) for the current TPU generation."""
    kind = ""
    try:
        kind = jax.devices()[0].device_kind.lower()
    except Exception:
        pass
    if ("v6" in kind) or ("v7" in kind) or ("7x" in kind):
        # v6e/v7x: default scoped VMEM is 32 MiB.  On v7x physical VMEM is only
        # 64 MiB, so stay under the 32 MiB scoped default rather than fight it.
        return 24 << 20, 32 << 20
    # v5e (16 MiB scoped default) and anything unknown: be conservative.
    return 12 << 20, 16 << 20


def _pick_channel_block(c, c_max=512):
    """Largest multiple-of-8 divisor of `c` that is <= c_max (or full c)."""
    if c <= c_max:
        return c
    for blk in range(c_max, 7, -8):
        if c % blk == 0:
            return blk
    return c  # no clean divisor: fall back to full-extent channel dim


def _pick_spatial_tile(hw, c_blk, itemsize, n_slabs, budget_bytes, cap=None):
    """Largest lane-axis tile (multiple of 128, or full extent) such that
    `n_slabs` double-buffered [c_blk, tile] slabs stay within `budget_bytes`."""
    per_lane = max(1, 2 * n_slabs * c_blk * itemsize)   # 2 = double buffering
    max_t = max(128, budget_bytes // per_lane)
    if cap is not None:
        max_t = max(128, min(max_t, cap))
    if hw <= max_t:
        return hw                                        # full extent: always legal
    return max(128, (max_t // 128) * 128)                # multiple of 128


# ---------------------------------------------------------------------------
# Pass 1: per-(batch, hw-split, channel) spatial sums of her.
# her block layout: [1, c_blk, tile_s]  (channels on sublanes, spatial on lanes).
# Grid: (B, n_split, C_blocks, blocks_per_split); spatial axis innermost.
# ---------------------------------------------------------------------------
def _pool_sum_kernel(her_ref, sum_ref, acc_ref, *, hw_total, tile_s,
                     blocks_per_split, any_edge):
    s = pl.program_id(3)

    @pl.when(s == 0)
    def _():
        acc_ref[...] = jnp.zeros_like(acc_ref)

    her = her_ref[0].astype(jnp.float32)                      # [c_blk, tile_s]

    if any_edge:
        # Only edge tiles (partial last tile, or the clamped duplicate block of
        # an odd split) pay for the mask; interior tiles take the cheap path.
        h = pl.program_id(1)
        start = (h * blocks_per_split + s) * tile_s           # nominal element offset
        is_edge = start + tile_s > hw_total

        @pl.when(jnp.logical_not(is_edge))
        def _():
            acc_ref[...] += jnp.sum(her, axis=-1, keepdims=True)

        @pl.when(is_edge)
        def _():
            lane = jax.lax.broadcasted_iota(jnp.int32, her.shape, 1)
            masked = jnp.where(start + lane < hw_total, her, 0.0)
            acc_ref[...] += jnp.sum(masked, axis=-1, keepdims=True)
    else:
        acc_ref[...] += jnp.sum(her, axis=-1, keepdims=True)

    @pl.when(s == pl.num_programs(3) - 1)
    def _():
        sum_ref[0, 0] = acc_ref[...]


# ---------------------------------------------------------------------------
# Pass 2: out = x * gate  (channel-wise gating, broadcast over the lane axis).
# ---------------------------------------------------------------------------
def _apply_gate_kernel(gate_ref, x_ref, out_ref):
    # gate_ref: [1, c_blk, 1] f32; x_ref/out_ref: [1, c_blk, tile_s] in x dtype.
    out_ref[0] = x_ref[0] * gate_ref[0].astype(x_ref.dtype)


def her_guided_channel_attention(x_nchw, her_nchw, w1, w2, *,
                                 pool_in_pallas=None, max_spatial_tile=None):
    """x_nchw: [B, C, H, W]; her_nchw: [B, C, Hh, Wh];
       w1: [Cr, C, 1, 1] (conv1 weight, no bias); w2: [C, Cr, 1, 1] (conv2 weight)."""
    B, C, H, W = x_nchw.shape
    Bh, Ch, Hh, Wh = her_nchw.shape
    assert B == Bh and C == Ch

    hw_x = H * W
    hw_h = Hh * Wh

    # NCHW is already [B, C, H*W]: pure reshape, no transpose / HBM round trip.
    x_bcs = x_nchw.reshape(B, C, hw_x)
    her_bcs = her_nchw.reshape(B, C, hw_h)

    budget, vmem_limit = _vmem_budget_and_limit()

    # ---- Pass 1: pooled sums over her ---------------------------------------
    if pool_in_pallas is None:
        # Tiny feature maps: launch + gate HBM round trip would dominate; let
        # XLA fuse the reduction instead.
        pool_in_pallas = hw_h >= 1024

    if pool_in_pallas:
        c_blk_h = _pick_channel_block(C)
        # n_slabs=2: one for the double-buffered her stream, one slot of headroom
        # for the in-kernel f32 upcast temporary of the tile.
        t_h = _pick_spatial_tile(hw_h, c_blk_h, her_bcs.dtype.itemsize,
                                 n_slabs=2, budget_bytes=budget,
                                 cap=max_spatial_tile)
        n_s = pl.cdiv(hw_h, t_h)
        n_split = 2 if n_s >= 2 else 1            # keep both v7x cores busy at B==1
        bps = pl.cdiv(n_s, n_split)               # spatial blocks per split
        any_edge = (hw_h % t_h != 0) or (n_split * bps != n_s)

        if n_split * bps == n_s:
            her_imap = lambda b, h, c, s: (b, c, h * bps + s)
        else:
            # Odd block count: last nominal block of split 1 is out of range;
            # clamp the DMA (its contribution is fully masked in-kernel).
            her_imap = lambda b, h, c, s: (b, c, jnp.minimum(h * bps + s, n_s - 1))

        partial_sums = pl.pallas_call(
            functools.partial(_pool_sum_kernel, hw_total=hw_h, tile_s=t_h,
                              blocks_per_split=bps, any_edge=any_edge),
            out_shape=jax.ShapeDtypeStruct((B, n_split, C, 1), jnp.float32),
            grid_spec=pltpu.PrefetchScalarGridSpec(
                num_scalar_prefetch=0,
                grid=(B, n_split, C // c_blk_h, bps),
                in_specs=[pl.BlockSpec((1, c_blk_h, t_h), her_imap)],
                out_specs=pl.BlockSpec((1, 1, c_blk_h, 1),
                                       lambda b, h, c, s: (b, h, c, 0)),
                scratch_shapes=[pltpu.VMEM((c_blk_h, 1), jnp.float32)],
            ),
            compiler_params=pltpu.CompilerParams(
                dimension_semantics=("parallel", "parallel", "parallel", "arbitrary"),
                vmem_limit_bytes=vmem_limit),
        )(her_bcs)
        pooled_sum = jnp.sum(partial_sums[..., 0], axis=1)            # [B, C] f32
    else:
        pooled_sum = jnp.sum(her_bcs.astype(jnp.float32), axis=-1)    # [B, C] f32

    # ---- Gate math in plain XLA (tiny: O(B*C*Cr) flops) ----------------------
    w1_mat = w1[:, :, 0, 0].astype(jnp.float32)   # [Cr, C]
    w2_mat = w2[:, :, 0, 0].astype(jnp.float32)   # [C, Cr]
    pool = pooled_sum * (1.0 / hw_h)                                   # [B, C]
    hidden = jnp.maximum(pool @ w1_mat.T, 0.0)                         # [B, Cr]
    gate = jax.nn.sigmoid(hidden @ w2_mat.T)[:, :, None]               # [B, C, 1] f32

    # ---- Pass 2: lane-dense channel gating of x ------------------------------
    c_blk_x = _pick_channel_block(C)
    t_x = _pick_spatial_tile(hw_x, c_blk_x, x_bcs.dtype.itemsize,
                             n_slabs=2, budget_bytes=budget,
                             cap=max_spatial_tile)
    out_bcs = pl.pallas_call(
        _apply_gate_kernel,
        out_shape=jax.ShapeDtypeStruct((B, C, hw_x), x_nchw.dtype),
        grid_spec=pltpu.PrefetchScalarGridSpec(
            num_scalar_prefetch=0,
            grid=(B, C // c_blk_x, pl.cdiv(hw_x, t_x)),
            in_specs=[
                pl.BlockSpec((1, c_blk_x, 1), lambda b, c, s: (b, c, 0)),
                pl.BlockSpec((1, c_blk_x, t_x), lambda b, c, s: (b, c, s)),
            ],
            out_specs=pl.BlockSpec((1, c_blk_x, t_x), lambda b, c, s: (b, c, s)),
        ),
        compiler_params=pltpu.CompilerParams(
            dimension_semantics=("parallel", "parallel", "parallel"),
            vmem_limit_bytes=vmem_limit),
    )(gate, x_bcs)

    return out_bcs.reshape(B, C, H, W)


def _reference(x, her, w1, w2):
    # Plain-JAX reference mirroring the PyTorch forward.
    pool = jnp.mean(her, axis=(2, 3), keepdims=True)               # [B, C, 1, 1]
    h = jnp.einsum("oc,bcij->boij", w1[:, :, 0, 0], pool)          # [B, Cr, 1, 1]
    h = jnp.maximum(h, 0.0)
    logits = jnp.einsum("oc,bcij->boij", w2[:, :, 0, 0], h)        # [B, C, 1, 1]
    gate = jax.nn.sigmoid(logits)
    return x * gate


def _run_case(key, B, C, H, W, Hh, Wh, reduction, **kwargs):
    Cr = max(1, C // reduction)
    k1, k2, k3, k4 = jax.random.split(key, 4)
    x = jax.random.normal(k1, (B, C, H, W), dtype=jnp.float32)
    her = jax.random.normal(k2, (B, C, Hh, Wh), dtype=jnp.float32)
    w1 = jax.random.normal(k3, (Cr, C, 1, 1), dtype=jnp.float32) * (1.0 / C) ** 0.5
    w2 = jax.random.normal(k4, (C, Cr, 1, 1), dtype=jnp.float32) * (1.0 / Cr) ** 0.5

    out = jax.block_until_ready(her_guided_channel_attention(x, her, w1, w2, **kwargs))
    ref = _reference(x, her, w1, w2)
    assert out.shape == (B, C, H, W)
    assert jnp.allclose(out, ref, atol=1e-4, rtol=1e-4), "mismatch vs reference"


if __name__ == "__main__":
    key = jax.random.PRNGKey(0)
    keys = jax.random.split(key, 3)

    # 1) Tiny feature map (the nominal test shape): gate pooling folds into XLA,
    #    Pallas handles the gating multiply.
    _run_case(keys[0], B=2, C=64, H=16, W=16, Hh=8, Wh=8, reduction=16)

    # 2) Single-tile Pallas pooling path (full-extent spatial tile).
    _run_case(keys[1], B=1, C=64, H=40, W=40, Hh=40, Wh=40, reduction=16,
              pool_in_pallas=True)

    # 3) Multi-tile Pallas pooling with an odd block count: exercises the HW
    #    split across two "parallel" halves, the clamped duplicate block and
    #    the masked partial last tile.
    _run_case(keys[2], B=1, C=32, H=44, W=50, Hh=44, Wh=50, reduction=16,
              pool_in_pallas=True, max_spatial_tile=256)

    print("KERNEL_OK")
</pallas_src>

<mosaic_0001>
module attributes {stable_mosaic.version = 11 : i64} {
  func.func @_apply_gate_kernel(%arg0: i32, %arg1: i32, %arg2: i32, %arg3: memref<1x64x1xf32, #tpu.memory_space<vmem>>, %arg4: memref<1x64x256xf32, #tpu.memory_space<vmem>>, %arg5: memref<1x64x256xf32, #tpu.memory_space<vmem>>) attributes {dimension_semantics = [#tpu.dimension_semantics<parallel>, #tpu.dimension_semantics<parallel>, #tpu.dimension_semantics<parallel>], iteration_bounds = array<i64: 2, 1, 1>, scalar_prefetch = 0 : i64, scratch_operands = 0 : i64, tpu.core_type = #tpu.core_type<tc>, window_params = [{transform_indices = @transform_0, window_bounds = array<i64: 1, 64, 1>}, {transform_indices = @transform_1, window_bounds = array<i64: 1, 64, 256>}, {transform_indices = @transform_2, window_bounds = array<i64: 1, 64, 256>}]} {
    %c0 = arith.constant 0 : index
    %c0_0 = arith.constant 0 : index
    %c0_1 = arith.constant 0 : index
    %0 = vector.load %arg4[%c0, %c0_0, %c0_1] : memref<1x64x256xf32, #tpu.memory_space<vmem>>, vector<1x64x256xf32>
    %1 = vector.shape_cast %0 : vector<1x64x256xf32> to vector<64x256xf32>
    %c0_2 = arith.constant 0 : index
    %c0_3 = arith.constant 0 : index
    %c0_4 = arith.constant 0 : index
    %2 = vector.load %arg3[%c0_2, %c0_3, %c0_4] : memref<1x64x1xf32, #tpu.memory_space<vmem>>, vector<1x64x1xf32>
    %3 = vector.shape_cast %2 : vector<1x64x1xf32> to vector<64x1xf32>
    %4 = vector.broadcast %3 : vector<64x1xf32> to vector<64x256xf32>
    %5 = arith.mulf %1, %4 : vector<64x256xf32>
    %c0_5 = arith.constant 0 : index
    %c0_6 = arith.constant 0 : index
    %c0_7 = arith.constant 0 : index
    %6 = vector.load %arg5[%c0_5, %c0_6, %c0_7] : memref<1x64x256xf32, #tpu.memory_space<vmem>>, vector<1x64x256xf32>
    %7 = vector.shape_cast %6 : vector<1x64x256xf32> to vector<64x256xf32>
    %8 = vector.shape_cast %5 : vector<64x256xf32> to vector<1x64x256xf32>
    tpu.vector_store %arg5[%c0_5, %c0_6, %c0_7], %8 {strides = array<i32>} : memref<1x64x256xf32, #tpu.memory_space<vmem>>, vector<1x64x256xf32>,
    return
  }
  func.func @transform_0(%arg0: i32, %arg1: i32, %arg2: i32) -> (i32, i32, i32) {
    %c0_i32 = arith.constant 0 : i32
    %c0_i32_0 = arith.constant 0 : i32
    return %arg0, %arg1, %c0_i32 : i32, i32, i32
  }
  func.func @transform_1(%arg0: i32, %arg1: i32, %arg2: i32) -> (i32, i32, i32) {
    %c0_i32 = arith.constant 0 : i32
    return %arg0, %arg1, %arg2 : i32, i32, i32
  }
  func.func @transform_2(%arg0: i32, %arg1: i32, %arg2: i32) -> (i32, i32, i32) {
    %c0_i32 = arith.constant 0 : i32
    return %arg0, %arg1, %arg2 : i32, i32, i32
  }
}

</mosaic_0001>

<llo_original>
// kernel: tpu_custom_call.1
$region0: #{tpu_custom_call.1}
  #allocation0 [shape = 'u32[]', space=smem, size = 0x4, offset = 0x4, fixed_abs, tag = 'smem constant byte address 0x4 - core index']
  #allocation1 [shape = 'u32[72,128]{1,0:T(1,128)}', space=vmem, size = 0x9000, scoped, tag = 'internal scratch']
  %s0 = inlined_call_operand.vmem [shape: f32[2,64,1], index: 0, kind: input, shape index: {}]
  %s1 = inlined_call_operand.hbm [shape: f32[2,64,256], index: 1, kind: input, shape index: {}]
  %s2 = inlined_call_operand.hbm [shape: f32[2,64,256], index: 2, kind: output, shape index: {}]
  %s3 = sld [smem:[#allocation0]]
  $region45: #{tpu_custom_call.1} parent=0
    _
  %s5 = ssub.s32 1, %s3
  %s6 = scalar_select 0, %s5, %s3
  $region1: #{tpu_custom_call.1} parent=0
    #allocation2 [shape = 'u8[131072]{0}', space=vmem, size = 0x20000, scoped, tag = 'input window, operand 1']
    #allocation3 [shape = 's32[2]{0}', space=sflag, size = 0x8, scoped, tag = 'scoped memory for tpu_custom_call.1']
    #allocation4 [shape = 's32[2]{0}', space=sflag, size = 0x8, scoped, tag = 'scoped memory for tpu_custom_call.1']
    #allocation5 [shape = 'u8[131072]{0}', space=vmem, size = 0x20000, scoped, tag = 'output window, operand 0']
    %7 = vsyncpa [#allocation3], 0
    %s8 = scalar_lea.sflag [#allocation3], 1
    %9 = vsyncpa %s8, 0
    %10 = vsyncpa [#allocation4], 0
    %s11 = scalar_lea.sflag [#allocation4], 1
    %12 = vsyncpa %s11, 0
    loop: start=0, step=1, limit=4
    $region2: #{tpu_custom_call.1} parent=1 // loop_pre_header
      _
    $region3: #{tpu_custom_call.1} parent=1 // loop_header
      %s14 = sphi 0, %s18
      %p15 = scmp.ge.s32.totalorder %s14, 4
      %s21 = sphi 0, %s40
      %s22 = sphi 0, %s36
      %s23 = sphi 0, %s32
      %s24 = sphi 0, %s21
      %s25 = sphi 0, %s22
      %s26 = sphi 0, %s23
      %s27 = sphi 0, %s24
      %s28 = sphi 0, %s25
      %s29 = sphi 0, %s26
      %s45 = sphi 0, %s47
      %s48 = sphi 0, %s45
      %s49 = sphi 0, %s48
      %s65 = sphi 0, %s49
      %s75 = sphi 0, %s77
      %s78 = sphi 0, %s75
      %s79 = sphi 0, %s78
      %s95 = sphi 0, %s79
      %s105 = sphi 0, %s107
      %s108 = sphi 0, %s105
      %s109 = sphi 0, %s108
      %s125 = sphi 0, %s109
    $region4: #{tpu_custom_call.1} parent=1 // loop_header_branch
      %17 = sbr.rel (%p15) target = $region8
    $region5: #{tpu_custom_call.1} parent=1 // loop_body
      %s19 = ssub.s32 %s14, 1
      %s20 = ssub.s32 %s14, 2
      %s30 = sadd.s32 1, %s23
      %p31 = scmp.ge.s32.totalorder %s30, 1
      %s32 = scalar_select %p31, 0, %s30
      %s33 = sadd.s32 1, %s22
      %s34 = scalar_select %p31, %s33, %s22
      %p35 = scmp.ge.s32.totalorder %s34, 1
      %s36 = scalar_select %p35, 0, %s34
      %s37 = sadd.s32 1, %s21
      %s38 = scalar_select %p35, %s37, %s21
      %p39 = scmp.ge.s32.totalorder %s38, 2
      %s40 = scalar_select %p39, 0, %s38
      %s41 = ssub.s32 %s21, %s40
      %s42 = ssub.s32 %s22, %s36
      %s43 = sor.u32 %s41, %s42
      %p44 = scmp.eq.s32.totalorder %s43, 0
      %s46 = sadd.s32 %s45, 1
      %s47 = scalar_select %p44, %s45, %s46
      %p50 = pneg %p44
      %p51 = scmp.eq.s32.totalorder %s14, 1
      %p52 = por %p50, %p51
      %p53 = scmp.ne.s32.totalorder %s45, %s48
      %p54 = scmp.eq.s32.totalorder %s14, 0
      %p55 = por %p53, %p54
      %p56 = scmp.ne.s32.totalorder %s45, %s48
      %p57 = scmp.eq.s32.totalorder %s19, 1
      %p58 = por %p56, %p57
      %p59 = scmp.ne.s32.totalorder %s48, %s49
      %p60 = scmp.eq.s32.totalorder %s19, 0
      %p61 = por %p59, %p60
      %p62 = scmp.ne.s32.totalorder %s48, %s49
      %p63 = scmp.eq.s32.totalorder %s20, 1
      %p64 = por %p62, %p63
      %p66 = scmp.ne.s32.totalorder %s49, %s65
      %p67 = scmp.eq.s32.totalorder %s20, 0
      %p68 = por %p66, %p67
      %s69 = ssub.s32 %s21, %s40
      %s70 = ssub.s32 %s22, %s36
      %s71 = sor.u32 %s69, %s70
      %s72 = ssub.s32 %s23, %s32
      %s73 = sor.u32 %s71, %s72
      %p74 = scmp.eq.s32.totalorder %s73, 0
      %s76 = sadd.s32 %s75, 1
      %s77 = scalar_select %p74, %s75, %s76
      %p80 = pneg %p74
      %p81 = scmp.eq.s32.totalorder %s14, 1
      %p82 = por %p80, %p81
      %p83 = scmp.ne.s32.totalorder %s75, %s78
      %p84 = scmp.eq.s32.totalorder %s14, 0
      %p85 = por %p83, %p84
      %p86 = scmp.ne.s32.totalorder %s75, %s78
      %p87 = scmp.eq.s32.totalorder %s19, 1
      %p88 = por %p86, %p87
      %p89 = scmp.ne.s32.totalorder %s78, %s79
      %p90 = scmp.eq.s32.totalorder %s19, 0
      %p91 = por %p89, %p90
      %p92 = scmp.ne.s32.totalorder %s78, %s79
      %p93 = scmp.eq.s32.totalorder %s20, 1
      %p94 = por %p92, %p93
      %p96 = scmp.ne.s32.totalorder %s79, %s95
      %p97 = scmp.eq.s32.totalorder %s20, 0
      %p98 = por %p96, %p97
      %s99 = ssub.s32 %s21, %s40
      %s100 = ssub.s32 %s22, %s36
      %s101 = sor.u32 %s99, %s100
      %s102 = ssub.s32 %s23, %s32
      %s103 = sor.u32 %s101, %s102
      %p104 = scmp.eq.s32.totalorder %s103, 0
      %s106 = sadd.s32 %s105, 1
      %s107 = scalar_select %p104, %s105, %s106
      %p110 = pneg %p104
      %p111 = scmp.eq.s32.totalorder %s14, 1
      %p112 = por %p110, %p111
      %p113 = scmp.ne.s32.totalorder %s105, %s108
      %p114 = scmp.eq.s32.totalorder %s14, 0
      %p115 = por %p113, %p114
      %p116 = scmp.ne.s32.totalorder %s105, %s108
      %p117 = scmp.eq.s32.totalorder %s19, 1
      %p118 = por %p116, %p117
      %p119 = scmp.ne.s32.totalorder %s108, %s109
      %p120 = scmp.eq.s32.totalorder %s19, 0
      %p121 = por %p119, %p120
      %p122 = scmp.ne.s32.totalorder %s108, %s109
      %p123 = scmp.eq.s32.totalorder %s20, 1
      %p124 = por %p122, %p123
      %p126 = scmp.ne.s32.totalorder %s109, %s125
      %p127 = scmp.eq.s32.totalorder %s20, 0
      %p128 = por %p126, %p127
      %p129 = scmp.le.s32.totalorder 1, %s14
      %p130 = scmp.lt.s32.totalorder %s14, 3
      %p131 = pnand %p129, %p130
      %p132 = pneg %p131
      // Predicated region
      $region9: #{tpu_custom_call.1} parent=5 // pred_check
        _
      $region10: #{tpu_custom_call.1} parent=5 // pred_check_branch
        %134 = sbr.rel (%p131) target = $region12
      $region11: #{tpu_custom_call.1} parent=5 // pred_region
        %s135 = ssub.s32 %s14, 1
      $region12: #{tpu_custom_call.1} parent=5 // pred_fallthru
        _
      %p136 = scmp.lt.s32.totalorder %s14, 2
      // Predicated region
      $region13: #{tpu_custom_call.1} parent=5 // pred_check
        %p137 = pneg %p136
      $region14: #{tpu_custom_call.1} parent=5 // pred_check_branch
        %139 = sbr.rel (%p137) target = $region16
      $region15: #{tpu_custom_call.1} parent=5 // pred_region
        // Predicated region
        $region17: #{tpu_custom_call.1} parent=15 // pred_check
          %p140 = pneg %p55
        $region18: #{tpu_custom_call.1} parent=15 // pred_check_branch
          %142 = sbr.rel (%p140) target = $region20
        $region19: #{tpu_custom_call.1} parent=15 // pred_region
          %s143 = smul.u32 8, %s22
          %p144 = scmp.lt.s32.totalorder %s21, 1
          %s145 = scalar_select %p144, %s21, 1
          %p146 = scmp.lt.s32.totalorder %s143, 7
          %s147 = scalar_select %p146, %s143, 7
          %s148 = smul.addr %s145, 8
          %s149 = sadd.s32 %s147, %s148
          %s150 = smul.addr %s149, 8
          %s151 = scalar_lea.vmem %s0, %s150
          %s152 = smul.u32 8, %s22
        $region20: #{tpu_custom_call.1} parent=15 // pred_fallthru
          _
        // Predicated region
        $region21: #{tpu_custom_call.1} parent=15 // pred_check
          %p153 = pneg %p85
        $region22: #{tpu_custom_call.1} parent=15 // pred_check_branch
          %155 = sbr.rel (%p153) target = $region24
        $region23: #{tpu_custom_call.1} parent=15 // pred_region
          %s156 = sand.u32 %s75, 1
          %s157 = scalar_lea.sflag [#allocation3], %s156
          %s158 = sand.u32 %s75, 1
          %s159 = smul.addr %s158, 128
          %s160 = scalar_lea.vmem [#allocation2], %s159
          %s161 = smul.u32 8, %s22
          %s162 = smul.u32 2, %s23
          %164 = vsyncadd %s157, 0
          %s165 = smul.addr %s161, 2
          %s166 = sadd.s32 %s162, %s165
          %s167 = smul.addr %s21, 16
          %s168 = sadd.s32 %s166, %s167
          %s169 = smul.addr %s168, 8
          %s170 = scalar_lea.hbm %s1, %s169
          %s171 = sshll.u32 %s170, 4
          %s172 = int_to_ptr.hbm [resolvable:$true] %s171
          %s173 = sshll.u32 %s160, 4
          %s174 = int_to_ptr.vmem [resolvable:$true] %s173
          %179 = dma.hbm_to_vmem [thread:$0]  %s172, 2048, %s174, %s157, 256, 256, 16
        $region24: #{tpu_custom_call.1} parent=15 // pred_fallthru
          _
      $region16: #{tpu_custom_call.1} parent=5 // pred_fallthru
        _
      %p180 = scmp.le.s32.totalorder 1, %s14
      %p181 = scmp.lt.s32.totalorder %s14, 3
      %p182 = pnand %p180, %p181
      %p183 = pneg %p182
      // Predicated region
      $region25: #{tpu_custom_call.1} parent=5 // pred_check
        _
      $region26: #{tpu_custom_call.1} parent=5 // pred_check_branch
        %185 = sbr.rel (%p182) target = $region28
      $region27: #{tpu_custom_call.1} parent=5 // pred_region
        %s186 = ssub.s32 %s14, 1
        %s187 = sand.u32 %s78, 1
        %s188 = scalar_lea.sflag [#allocation3], %s187
        %s189 = sand.u32 %s78, 1
        %s190 = smul.addr %s189, 128
        %s191 = scalar_lea.vmem [#allocation2], %s190
        // Predicated region
        $region29: #{tpu_custom_call.1} parent=27 // pred_check
          %p192 = pneg %p91
        $region30: #{tpu_custom_call.1} parent=27 // pred_check_branch
          %194 = sbr.rel (%p192) target = $region32
        $region31: #{tpu_custom_call.1} parent=27 // pred_region
          %196 = dma.done %s188, 2048
        $region32: #{tpu_custom_call.1} parent=27 // pred_fallthru
          _
        %s197 = smul.u32 8, %s25
        %p198 = scmp.lt.s32.totalorder %s24, 1
        %s199 = scalar_select %p198, %s24, 1
        %p200 = scmp.lt.s32.totalorder %s197, 7
        %s201 = scalar_select %p200, %s197, 7
        %s202 = smul.addr %s199, 8
        %s203 = sadd.s32 %s201, %s202
        %s204 = smul.addr %s203, 8
        %s205 = scalar_lea.vmem %s0, %s204
        %p206 = pneg %p61
        %p207 = pneg %p58
        %s208 = sand.u32 %s78, 1
        %s209 = scalar_lea.sflag [#allocation3], %s208
        %s210 = sand.u32 %s78, 1
        %s211 = smul.addr %s210, 128
        %s212 = scalar_lea.vmem [#allocation2], %s211
        %p213 = pneg %p91
        %p214 = pneg %p88
        %p215 = pneg %p121
        %p216 = pneg %p118
        %s217 = sand.u32 %s108, 1
        %s218 = scalar_lea.sflag [#allocation4], %s217
        %s219 = sand.u32 %s108, 1
        %s220 = smul.addr %s219, 128
        %s221 = scalar_lea.vmem [#allocation5], %s220
        %s222 = smul.u32 8, %s25
        %p223 = scmp.lt.s32.totalorder %s24, 1
        %s224 = scalar_select %p223, %s24, 1
        %p225 = scmp.lt.s32.totalorder %s222, 7
        %s226 = scalar_select %p225, %s222, 7
        %s227 = smul.addr %s224, 8
        %s228 = sadd.s32 %s226, %s227
        %s229 = smul.addr %s228, 8
        %s230 = scalar_lea.vmem %s0, %s229
        %s231 = smul.u32 8, %s25
        %s232 = smul.u32 8, %s25
        %s233 = smul.u32 2, %s26
        %s234 = smul.u32 8, %s25
        %s235 = smul.u32 2, %s26
        %v236 = vld [vmem:[%s191] sm:$0xff]
        %v237 = vld [vmem:[%s191 + $0x8] sm:$0xff]
        %v238 = vld [vmem:[%s191 + $0x10] sm:$0xff]
        %v239 = vld [vmem:[%s191 + $0x18] sm:$0xff]
        %v240 = vld [vmem:[%s191 + $0x20] sm:$0xff]
        %v241 = vld [vmem:[%s191 + $0x28] sm:$0xff]
        %v242 = vld [vmem:[%s191 + $0x30] sm:$0xff]
        %v243 = vld [vmem:[%s191 + $0x38] sm:$0xff]
        %v244 = vld [vmem:[%s191 + $0x40] sm:$0xff]
        %v245 = vld [vmem:[%s191 + $0x48] sm:$0xff]
        %v246 = vld [vmem:[%s191 + $0x50] sm:$0xff]
        %v247 = vld [vmem:[%s191 + $0x58] sm:$0xff]
        %v248 = vld [vmem:[%s191 + $0x60] sm:$0xff]
        %v249 = vld [vmem:[%s191 + $0x68] sm:$0xff]
        %v250 = vld [vmem:[%s191 + $0x70] sm:$0xff]
        %v251 = vld [vmem:[%s191 + $0x78] sm:$0xff]
        %v252 = vld [vmem:[%s230] sm:$0xff]
        %v253 = vld [vmem:[%s230 + $0x8] sm:$0xff]
        %v254 = vld [vmem:[%s230 + $0x10] sm:$0xff]
        %v255 = vld [vmem:[%s230 + $0x18] sm:$0xff]
        %v256 = vld [vmem:[%s230 + $0x20] sm:$0xff]
        %v257 = vld [vmem:[%s230 + $0x28] sm:$0xff]
        %v258 = vld [vmem:[%s230 + $0x30] sm:$0xff]
        %v259 = vld [vmem:[%s230 + $0x38] sm:$0xff]
        %261 = vset.pattern.permute.xlu0 0
        %262 = vperm.xlu0 %261, %v252
        %v263 = vpop.permute.xlu0 %262
        %266 = vset.pattern.permute.xlu0 0
        %267 = vperm.xlu0 %266, %v253
        %v268 = vpop.permute.xlu0 %267
        %271 = vset.pattern.permute.xlu0 0
        %272 = vperm.xlu0 %271, %v254
        %v273 = vpop.permute.xlu0 %272
        %276 = vset.pattern.permute.xlu0 0
        %277 = vperm.xlu0 %276, %v255
        %v278 = vpop.permute.xlu0 %277
        %281 = vset.pattern.permute.xlu0 0
        %282 = vperm.xlu0 %281, %v256
        %v283 = vpop.permute.xlu0 %282
        %286 = vset.pattern.permute.xlu0 0
        %287 = vperm.xlu0 %286, %v257
        %v288 = vpop.permute.xlu0 %287
        %291 = vset.pattern.permute.xlu0 0
        %292 = vperm.xlu0 %291, %v258
        %v293 = vpop.permute.xlu0 %292
        %296 = vset.pattern.permute.xlu0 0
        %297 = vperm.xlu0 %296, %v259
        %v298 = vpop.permute.xlu0 %297
        %v300 = vmul.f32 %v236, %v263
        %v301 = vmul.f32 %v237, %v263
        %v302 = vmul.f32 %v238, %v268
        %v303 = vmul.f32 %v239, %v268
        %v304 = vmul.f32 %v240, %v273
        %v305 = vmul.f32 %v241, %v273
        %v306 = vmul.f32 %v242, %v278
        %v307 = vmul.f32 %v243, %v278
        %v308 = vmul.f32 %v244, %v283
        %v309 = vmul.f32 %v245, %v283
        %v310 = vmul.f32 %v246, %v288
        %v311 = vmul.f32 %v247, %v288
        %v312 = vmul.f32 %v248, %v293
        %v313 = vmul.f32 %v249, %v293
        %v314 = vmul.f32 %v250, %v298
        %v315 = vmul.f32 %v251, %v298
        %316 = vst [vmem:[%s221] sm:$0xff] %v300
        %317 = vst [vmem:[%s221 + $0x8] sm:$0xff] %v301
        %318 = vst [vmem:[%s221 + $0x10] sm:$0xff] %v302
        %319 = vst [vmem:[%s221 + $0x18] sm:$0xff] %v303
        %320 = vst [vmem:[%s221 + $0x20] sm:$0xff] %v304
        %321 = vst [vmem:[%s221 + $0x28] sm:$0xff] %v305
        %322 = vst [vmem:[%s221 + $0x30] sm:$0xff] %v306
        %323 = vst [vmem:[%s221 + $0x38] sm:$0xff] %v307
        %324 = vst [vmem:[%s221 + $0x40] sm:$0xff] %v308
        %325 = vst [vmem:[%s221 + $0x48] sm:$0xff] %v309
        %326 = vst [vmem:[%s221 + $0x50] sm:$0xff] %v310
        %327 = vst [vmem:[%s221 + $0x58] sm:$0xff] %v311
        %328 = vst [vmem:[%s221 + $0x60] sm:$0xff] %v312
        %329 = vst [vmem:[%s221 + $0x68] sm:$0xff] %v313
        %330 = vst [vmem:[%s221 + $0x70] sm:$0xff] %v314
        %331 = vst [vmem:[%s221 + $0x78] sm:$0xff] %v315
        %s332 = sand.u32 %s108, 1
        %s333 = scalar_lea.sflag [#allocation4], %s332
        %s334 = sand.u32 %s108, 1
        %s335 = smul.addr %s334, 128
        %s336 = scalar_lea.vmem [#allocation5], %s335
        // Predicated region
        $region33: #{tpu_custom_call.1} parent=27 // pred_check
          %p337 = pneg %p118
        $region34: #{tpu_custom_call.1} parent=27 // pred_check_branch
          %339 = sbr.rel (%p337) target = $region36
        $region35: #{tpu_custom_call.1} parent=27 // pred_region
          %s340 = smul.u32 8, %s25
          %s341 = smul.u32 2, %s26
          %343 = vsyncadd %s333, 0
          %s344 = smul.addr %s340, 2
          %s345 = sadd.s32 %s341, %s344
          %s346 = smul.addr %s24, 16
          %s347 = sadd.s32 %s345, %s346
          %s348 = smul.addr %s347, 8
          %s349 = scalar_lea.hbm %s2, %s348
          %s350 = sshll.u32 %s336, 4
          %s351 = int_to_ptr.vmem [resolvable:$true] %s350
          %s352 = sshll.u32 %s349, 4
          %s353 = int_to_ptr.hbm [resolvable:$true] %s352
          %358 = dma.vmem_to_hbm [thread:$0]  %s351, 2048, %s353, %s333, 256, 256, 16
        $region36: #{tpu_custom_call.1} parent=27 // pred_fallthru
          _
      $region28: #{tpu_custom_call.1} parent=5 // pred_fallthru
        _
      %p359 = scmp.le.s32.totalorder 2, %s14
      // Predicated region
      $region37: #{tpu_custom_call.1} parent=5 // pred_check
        %p360 = pneg %p359
      $region38: #{tpu_custom_call.1} parent=5 // pred_check_branch
        %362 = sbr.rel (%p360) target = $region40
      $region39: #{tpu_custom_call.1} parent=5 // pred_region
        %s363 = ssub.s32 %s14, 2
        // Predicated region
        $region41: #{tpu_custom_call.1} parent=39 // pred_check
          %p364 = pneg %p124
        $region42: #{tpu_custom_call.1} parent=39 // pred_check_branch
          %366 = sbr.rel (%p364) target = $region44
        $region43: #{tpu_custom_call.1} parent=39 // pred_region
          %s367 = sand.u32 %s109, 1
          %s368 = scalar_lea.sflag [#allocation4], %s367
          %s369 = sand.u32 %s109, 1
          %s370 = smul.addr %s369, 128
          %s371 = scalar_lea.vmem [#allocation5], %s370
          %373 = dma.done %s368, 2048
        $region44: #{tpu_custom_call.1} parent=39 // pred_fallthru
          _
      $region40: #{tpu_custom_call.1} parent=5 // pred_fallthru
        _
    $region6: #{tpu_custom_call.1} parent=1 // loop_footer
      %s18 = sadd.s32 1, %s14
    $region7: #{tpu_custom_call.1} parent=1 // loop_footer_branch
      %13 = sbr.rel target = $region3
    $region8: #{tpu_custom_call.1} parent=1 // loop_exit
      _
    %374 = vsyncpa [#allocation3], 1
    %s375 = scalar_lea.sflag [#allocation3], 1
    %376 = vsyncpa %s375, 1
    %377 = vsyncpa [#allocation4], 1
    %s378 = scalar_lea.sflag [#allocation4], 1
    %379 = vsyncpa %s378, 1

</llo_original>
